<compile_context>
chip_gen: v5e
topology: v5e:2x2
jax: 0.10.0
libtpu: 0.0.40
codegen_flags: <defaults>
</compile_context>

<pallas_src>
import functools

import jax
import jax.numpy as jnp
from jax.experimental import pallas as pl
from jax.experimental.pallas import tpu as pltpu

EPS = 1e-6  # LayerNorm eps used by the reference ViT blocks


# ---------------------------------------------------------------------------
# small helpers
# ---------------------------------------------------------------------------
def _tpu_vmem_capacity():
    try:
        return int(pltpu.get_tpu_info().vmem_capacity_bytes)
    except Exception:
        return 128 << 20  # v5e / v6e default


_VMEM_CAPACITY = _tpu_vmem_capacity()
_BUFFER_ONE_BYTES = 2 << 20  # single-buffer const weights above this size


def _layernorm(x, g, b):
    # statistics kept in f32
    mu = jnp.mean(x, axis=-1, keepdims=True)
    var = jnp.mean((x - mu) ** 2, axis=-1, keepdims=True)
    return (x - mu) * jax.lax.rsqrt(var + EPS) * g + b


def _round_up(x, m):
    return ((x + m - 1) // m) * m


def _pick_row_tile(rows):
    # Pick a row tile that amortizes per-grid-step overhead while still giving
    # >= 2 grid steps (pipeline overlap / second TensorCore on v7x) whenever
    # possible.  Row-wise kernels are independent per row, so the trailing
    # partial block is simply masked by Pallas.
    if rows <= 8:
        return rows                     # full-dim block (always legal)
    if rows >= 2048:
        return 512
    if rows >= 1024:
        return 256
    if rows >= 256:
        return 128
    return max(8, _round_up(pl.cdiv(rows, 2), 8))


def _const_spec(a):
    # Full-array block with a constant index_map (weight stays VMEM-resident).
    # Large grid-invariant weights use a single buffer: default double
    # buffering would hold two copies of e.g. a 9-13 MiB ViT-L/H MLP weight,
    # which collides with v7x's 64 MiB VMEM for zero benefit.
    zeros = (0,) * a.ndim
    nbytes = a.size * a.dtype.itemsize
    if nbytes >= _BUFFER_ONE_BYTES:
        return pl.BlockSpec(a.shape, lambda *args: zeros,
                            pipeline_mode=pl.Buffered(1))
    return pl.BlockSpec(a.shape, lambda *args: zeros)


def _compiler_params(semantics, block_bytes):
    # Raise the scoped VMEM limit only if the (double-buffered) footprint may
    # exceed the smallest per-generation default (16 MiB on v5e).  The cap is
    # generation-aware: never request more than 3/4 of physical VMEM
    # (~48 MiB on v7x, 64 MiB on v5e/v6e).
    kwargs = {"dimension_semantics": semantics}
    need = int(block_bytes) * 2 + (2 << 20)
    if need > (16 << 20):
        cap = min(64 << 20, (_VMEM_CAPACITY * 3) // 4)
        kwargs["vmem_limit_bytes"] = int(min(max(need, 32 << 20), cap))
    return pltpu.CompilerParams(**kwargs)


# ---------------------------------------------------------------------------
# kernel 1: patch embedding (conv-as-matmul) fused with cls-token + pos_embed
# ---------------------------------------------------------------------------
def _embed_kernel(x_ref, w_ref, b_ref, cls_ref, pos_ref, o_ref):
    x = x_ref[0]                                             # (N, C*P*P) bf16
    pe = jnp.dot(x, w_ref[...],
                 preferred_element_type=jnp.float32) + b_ref[...]   # (N, H) f32
    tokens = jnp.concatenate([cls_ref[0], pe], axis=0)       # (N+1, H) f32
    o_ref[0] = (tokens + pos_ref[0]).astype(o_ref.dtype)


def embed_pallas(patches, params):
    B, N, K = patches.shape
    H = params["patch_w"].shape[1]
    S = N + 1
    extras = (params["patch_w"], params["patch_b"],
              params["cls_token"], params["pos_embed"])
    vmem_need = N * K * 2 + S * H * (4 + 2)
    for a in extras:
        vmem_need += a.size * a.dtype.itemsize
    return pl.pallas_call(
        _embed_kernel,
        out_shape=jax.ShapeDtypeStruct((B, S, H), jnp.bfloat16),
        grid=(B,),
        in_specs=[pl.BlockSpec((1, N, K), lambda i: (i, 0, 0))]
                 + [_const_spec(a) for a in extras],
        out_specs=pl.BlockSpec((1, S, H), lambda i: (i, 0, 0)),
        compiler_params=_compiler_params(("parallel",), vmem_need),
    )(patches, *extras)


# ---------------------------------------------------------------------------
# kernel 2: attention half of the encoder block
#   x + ( softmax(Q K^T / sqrt(dh)) V ) Wo,  Q,K,V from one fused (H,3H) matmul,
#   batched over heads with a single pair of einsums (no per-head Python loop).
# ---------------------------------------------------------------------------
def _attn_block_kernel(num_heads, x_ref, g_ref, b_ref, wqkv_ref, bqkv_ref,
                       wo_ref, bo_ref, o_ref):
    x = x_ref[0].astype(jnp.float32)               # (S, H)
    S, H = x.shape
    dh = H // num_heads
    scale = 1.0 / (dh ** 0.5)

    xn = _layernorm(x, g_ref[...], b_ref[...])
    qkv = jnp.dot(xn.astype(jnp.bfloat16), wqkv_ref[...],
                  preferred_element_type=jnp.float32) + bqkv_ref[...]   # (S, 3H)

    # Batched per-head attention: scale folded into q (cheaper on (S,H) than
    # on the (nh,S,S) scores); contraction over the last dim of both q and k
    # avoids an explicit k.T lane transpose.
    q = (qkv[:, :H] * scale).reshape(S, num_heads, dh).astype(jnp.bfloat16)
    k = qkv[:, H:2 * H].reshape(S, num_heads, dh).astype(jnp.bfloat16)
    v = qkv[:, 2 * H:].reshape(S, num_heads, dh).astype(jnp.bfloat16)

    s = jnp.einsum('qnd,knd->nqk', q, k,
                   preferred_element_type=jnp.float32)        # (nh, S, S) f32
    s = s - jnp.max(s, axis=-1, keepdims=True)
    e = jnp.exp(s)
    # approx reciprocal runs on the EUP slot; ~1e-4 rel error (inference OK)
    p = e * pl.reciprocal(jnp.sum(e, axis=-1, keepdims=True), approx=True)
    ctx = jnp.einsum('nqk,knd->qnd', p.astype(jnp.bfloat16), v,
                     preferred_element_type=jnp.float32)      # (S, nh, dh) f32
    ctx = ctx.reshape(S, H)

    out = x + jnp.dot(ctx.astype(jnp.bfloat16), wo_ref[...],
                      preferred_element_type=jnp.float32) + bo_ref[...]
    o_ref[0] = out.astype(o_ref.dtype)


def attention_block(x, p, num_heads):
    # TODO(synk): for B == 1 deployments add a query-tile grid axis so the
    # second TensorCore on v7x has work; with B >= 2 the batch axis already
    # provides a parallel grid.
    B, S, H = x.shape
    extras = (p["ln1_g"], p["ln1_b"], p["wqkv"], p["bqkv"], p["wo"], p["bo"])
    vmem_need = S * H * (2 + 2)               # x in/out (bf16)
    vmem_need += S * 3 * H * 4                # qkv (f32)
    vmem_need += 2 * num_heads * S * S * 4    # scores + probs (f32)
    vmem_need += 2 * S * H * 4                # ctx + residual temporaries
    for a in extras:
        vmem_need += a.size * a.dtype.itemsize
    return pl.pallas_call(
        functools.partial(_attn_block_kernel, num_heads),
        out_shape=jax.ShapeDtypeStruct((B, S, H), jnp.bfloat16),
        grid=(B,),
        in_specs=[pl.BlockSpec((1, S, H), lambda i: (i, 0, 0))]
                 + [_const_spec(a) for a in extras],
        out_specs=pl.BlockSpec((1, S, H), lambda i: (i, 0, 0)),
        compiler_params=_compiler_params(("parallel",), vmem_need),
    )(x, *extras)


# ---------------------------------------------------------------------------
# kernel 3: row-tiled kernels (rows = flattened batch*seq, hidden on lanes)
# ---------------------------------------------------------------------------
def _ln_matmul_kernel(x_ref, g_ref, b_ref, w_ref, bias_ref, o_ref):
    x = x_ref[...].astype(jnp.float32)
    xn = _layernorm(x, g_ref[...], b_ref[...])
    out = jnp.dot(xn.astype(jnp.bfloat16), w_ref[...],
                  preferred_element_type=jnp.float32) + bias_ref[...]
    o_ref[...] = out.astype(o_ref.dtype)


def _mlp_kernel(x_ref, g_ref, b_ref, w1_ref, b1_ref, w2_ref, b2_ref, o_ref):
    x = x_ref[...].astype(jnp.float32)
    xn = _layernorm(x, g_ref[...], b_ref[...])
    h = jnp.dot(xn.astype(jnp.bfloat16), w1_ref[...],
                preferred_element_type=jnp.float32) + b1_ref[...]
    # exact (erf) GELU to match torch.nn.functional.gelu default
    h = jax.nn.gelu(h, approximate=False)
    out = x + jnp.dot(h.astype(jnp.bfloat16), w2_ref[...],
                      preferred_element_type=jnp.float32) + b2_ref[...]
    o_ref[...] = out.astype(o_ref.dtype)


def _row_tiled_call(kernel, x2d, extras, out_cols, out_dtype):
    R, H = x2d.shape
    tile = _pick_row_tile(R)
    grid = pl.cdiv(R, tile)

    inner = max(int(a.shape[-1]) for a in extras)
    vmem_need = tile * (H + out_cols) * 4 + tile * inner * 4
    for a in extras:
        vmem_need += a.size * a.dtype.itemsize

    return pl.pallas_call(
        kernel,
        out_shape=jax.ShapeDtypeStruct((R, out_cols), out_dtype),
        grid=(grid,),
        in_specs=[pl.BlockSpec((tile, H), lambda i: (i, 0))]
                 + [_const_spec(a) for a in extras],
        out_specs=pl.BlockSpec((tile, out_cols), lambda i: (i, 0)),
        compiler_params=_compiler_params(("parallel",), vmem_need),
    )(x2d, *extras)


def mlp_block(x, p):
    B, S, H = x.shape
    extras = (p["ln2_g"], p["ln2_b"], p["w1"], p["b1"], p["w2"], p["b2"])
    out = _row_tiled_call(_mlp_kernel, x.reshape(B * S, H), extras, H,
                          jnp.bfloat16)
    return out.reshape(B, S, H)


def head_pallas(cls_out, params):
    num_classes = params["head_w"].shape[1]
    nc_pad = max(128, _round_up(num_classes, 128))   # lane-dense output stores
    hw, hb = params["head_w"], params["head_b"]
    if nc_pad != num_classes:
        hw = jnp.pad(hw, ((0, 0), (0, nc_pad - num_classes)))
        hb = jnp.pad(hb, ((0, 0), (0, nc_pad - num_classes)))
    extras = (params["enc_ln_g"], params["enc_ln_b"], hw, hb)
    out = _row_tiled_call(_ln_matmul_kernel, cls_out, extras, nc_pad,
                          jnp.float32)
    return out[:, :num_classes]


# ---------------------------------------------------------------------------
# JAX glue: patch extraction, param init, full forward
# ---------------------------------------------------------------------------
def extract_patches(x, patch):
    # x: (B, C, H, W) NCHW  ->  (B, num_patches, C*patch*patch)
    B, C, Hi, Wi = x.shape
    Hp, Wp = Hi // patch, Wi // patch
    x = x.reshape(B, C, Hp, patch, Wp, patch)
    x = x.transpose(0, 2, 4, 1, 3, 5)                  # (B, Hp, Wp, C, p, p)
    return x.reshape(B, Hp * Wp, C * patch * patch)


def init_params(key, *, img_size, patch, in_channels, hidden, mlp_dim,
                num_layers, num_classes):
    keys = iter(jax.random.split(key, 8 + 8 * num_layers))

    def nrm(shape, dtype=jnp.bfloat16, std=0.02):
        w = std * jax.random.normal(next(keys), shape, dtype=jnp.float32)
        return w.astype(dtype)

    num_patches = (img_size // patch) ** 2
    cpp = in_channels * patch * patch

    params = {
        "patch_size": patch,
        # conv weight (hidden, C, P, P) flattened & transposed -> (C*P*P, hidden)
        "patch_w": nrm((cpp, hidden)),                               # bf16
        "patch_b": jnp.zeros((1, hidden), jnp.float32),
        "cls_token": nrm((1, 1, hidden), dtype=jnp.float32),
        "pos_embed": nrm((1, num_patches + 1, hidden), dtype=jnp.float32),
        "enc_ln_g": jnp.ones((1, hidden), jnp.float32),
        "enc_ln_b": jnp.zeros((1, hidden), jnp.float32),
        "head_w": nrm((hidden, num_classes)),                        # bf16
        "head_b": jnp.zeros((1, num_classes), jnp.float32),
        "layers": [],
    }
    for _ in range(num_layers):
        layer = {
            "ln1_g": jnp.ones((1, hidden), jnp.float32),
            "ln1_b": jnp.zeros((1, hidden), jnp.float32),
            # fused [Wq | Wk | Wv] -> one wide matmul
            "wqkv": nrm((hidden, 3 * hidden)),                       # bf16
            "bqkv": jnp.zeros((1, 3 * hidden), jnp.float32),
            "wo": nrm((hidden, hidden)),                             # bf16
            "bo": jnp.zeros((1, hidden), jnp.float32),
            "ln2_g": jnp.ones((1, hidden), jnp.float32),
            "ln2_b": jnp.zeros((1, hidden), jnp.float32),
            "w1": nrm((hidden, mlp_dim)),                            # bf16
            "b1": jnp.zeros((1, mlp_dim), jnp.float32),
            "w2": nrm((mlp_dim, hidden)),                            # bf16
            "b2": jnp.zeros((1, hidden), jnp.float32),
        }
        params["layers"].append(layer)
    return params


def vit_forward(x, params, num_heads):
    patches = extract_patches(x, params["patch_size"])       # (B, N, C*P*P)
    patches = patches.astype(jnp.bfloat16)                   # halve embed DMA
    # fused: patch linear + cls concat + pos_embed add        -> (B, N+1, H)
    h = embed_pallas(patches, params)
    # pos_drop: eval-mode identity
    for layer in params["layers"]:
        h = attention_block(h, layer, num_heads)              # x + MHSA(LN1(x))
        h = mlp_block(h, layer)                                # x + MLP(LN2(x))
    cls_out = h[:, 0]                                          # (B, H) bf16
    logits = head_pallas(cls_out, params)                      # enc LN + head
    return logits


if __name__ == "__main__":
    # small, deterministic configuration
    B, C, IMG, PATCH = 2, 4, 16, 8
    HIDDEN, HEADS, MLP, LAYERS, CLASSES = 32, 4, 64, 2, 8

    key = jax.random.PRNGKey(0)
    k_x, k_p = jax.random.split(key)
    x = jax.random.normal(k_x, (B, C, IMG, IMG), dtype=jnp.float32)  # NCHW

    params = init_params(
        k_p, img_size=IMG, patch=PATCH, in_channels=C, hidden=HIDDEN,
        mlp_dim=MLP, num_layers=LAYERS, num_classes=CLASSES)

    logits = vit_forward(x, params, HEADS)
    jax.block_until_ready(logits)
    assert logits.shape == (B, CLASSES)
    print("KERNEL_OK")
</pallas_src>

<mosaic_0001>
module attributes {stable_mosaic.version = 11 : i64} {
  func.func @_embed_kernel(%arg0: i32, %arg1: memref<1x4x256xbf16, #tpu.memory_space<vmem>>, %arg2: memref<256x32xbf16, #tpu.memory_space<vmem>>, %arg3: memref<1x32xf32, #tpu.memory_space<vmem>>, %arg4: memref<1x1x32xf32, #tpu.memory_space<vmem>>, %arg5: memref<1x5x32xf32, #tpu.memory_space<vmem>>, %arg6: memref<1x5x32xbf16, #tpu.memory_space<vmem>>) attributes {dimension_semantics = [#tpu.dimension_semantics<parallel>], iteration_bounds = array<i64: 2>, scalar_prefetch = 0 : i64, scratch_operands = 0 : i64, tpu.core_type = #tpu.core_type<tc>, window_params = [{transform_indices = @transform_0, window_bounds = array<i64: 1, 4, 256>}, {pipeline_mode = #tpu.pipeline_mode<synchronous>, transform_indices = @transform_1, window_bounds = array<i64: 256, 32>}, {pipeline_mode = #tpu.pipeline_mode<synchronous>, transform_indices = @transform_2, window_bounds = array<i64: 1, 32>}, {pipeline_mode = #tpu.pipeline_mode<synchronous>, transform_indices = @transform_3, window_bounds = array<i64: 1, 1, 32>}, {pipeline_mode = #tpu.pipeline_mode<synchronous>, transform_indices = @transform_4, window_bounds = array<i64: 1, 5, 32>}, {transform_indices = @transform_5, window_bounds = array<i64: 1, 5, 32>}]} {
    %c0 = arith.constant 0 : index
    %c0_0 = arith.constant 0 : index
    %c0_1 = arith.constant 0 : index
    %0 = vector.load %arg1[%c0, %c0_0, %c0_1] : memref<1x4x256xbf16, #tpu.memory_space<vmem>>, vector<1x4x256xbf16>
    %1 = vector.shape_cast %0 : vector<1x4x256xbf16> to vector<4x256xbf16>
    %c0_2 = arith.constant 0 : index
    %c0_3 = arith.constant 0 : index
    %2 = vector.load %arg2[%c0_2, %c0_3] : memref<256x32xbf16, #tpu.memory_space<vmem>>, vector<256x32xbf16>
    %cst = arith.constant dense<0.000000e+00> : vector<4x32xf32>
    %3 = tpu.matmul %1, %2, %cst {dimension_numbers = #tpu.dot_dimension_numbers<[1], [0], [0], [1], [0, 0, 1, 1], [], []>} : vector<4x256xbf16>, vector<256x32xbf16>, vector<4x32xf32> -> vector<4x32xf32>
    %c0_4 = arith.constant 0 : index
    %c0_5 = arith.constant 0 : index
    %4 = vector.load %arg3[%c0_4, %c0_5] : memref<1x32xf32, #tpu.memory_space<vmem>>, vector<1x32xf32>
    %5 = vector.broadcast %4 : vector<1x32xf32> to vector<4x32xf32>
    %6 = arith.addf %3, %5 : vector<4x32xf32>
    %c0_6 = arith.constant 0 : index
    %c0_7 = arith.constant 0 : index
    %c0_8 = arith.constant 0 : index
    %7 = vector.load %arg4[%c0_6, %c0_7, %c0_8] : memref<1x1x32xf32, #tpu.memory_space<vmem>>, vector<1x1x32xf32>
    %8 = vector.shape_cast %7 : vector<1x1x32xf32> to vector<1x32xf32>
    %9 = tpu.concatenate %8, %6 in 0 : vector<1x32xf32>, vector<4x32xf32> -> vector<5x32xf32>
    %c0_9 = arith.constant 0 : index
    %c0_10 = arith.constant 0 : index
    %c0_11 = arith.constant 0 : index
    %10 = vector.load %arg5[%c0_9, %c0_10, %c0_11] : memref<1x5x32xf32, #tpu.memory_space<vmem>>, vector<1x5x32xf32>
    %11 = vector.shape_cast %10 : vector<1x5x32xf32> to vector<5x32xf32>
    %12 = arith.addf %9, %11 : vector<5x32xf32>
    %13 = arith.truncf %12 : vector<5x32xf32> to vector<5x32xbf16>
    %c0_12 = arith.constant 0 : index
    %c0_13 = arith.constant 0 : index
    %c0_14 = arith.constant 0 : index
    %14 = vector.load %arg6[%c0_12, %c0_13, %c0_14] : memref<1x5x32xbf16, #tpu.memory_space<vmem>>, vector<1x5x32xbf16>
    %15 = vector.shape_cast %14 : vector<1x5x32xbf16> to vector<5x32xbf16>
    %16 = vector.shape_cast %13 : vector<5x32xbf16> to vector<1x5x32xbf16>
    tpu.vector_store %arg6[%c0_12, %c0_13, %c0_14], %16 {strides = array<i32>} : memref<1x5x32xbf16, #tpu.memory_space<vmem>>, vector<1x5x32xbf16>,
    return
  }
  func.func @transform_0(%arg0: i32) -> (i32, i32, i32) {
    %c0_i32 = arith.constant 0 : i32
    %c0_i32_0 = arith.constant 0 : i32
    %c0_i32_1 = arith.constant 0 : i32
    return %arg0, %c0_i32, %c0_i32_0 : i32, i32, i32
  }
  func.func @transform_1(%arg0: i32) -> (i32, i32) {
    %c0_i32 = arith.constant 0 : i32
    %c0_i32_0 = arith.constant 0 : i32
    %c0_i32_1 = arith.constant 0 : i32
    return %c0_i32, %c0_i32_0 : i32, i32
  }
  func.func @transform_2(%arg0: i32) -> (i32, i32) {
    %c0_i32 = arith.constant 0 : i32
    %c0_i32_0 = arith.constant 0 : i32
    %c0_i32_1 = arith.constant 0 : i32
    return %c0_i32, %c0_i32_0 : i32, i32
  }
  func.func @transform_3(%arg0: i32) -> (i32, i32, i32) {
    %c0_i32 = arith.constant 0 : i32
    %c0_i32_0 = arith.constant 0 : i32
    %c0_i32_1 = arith.constant 0 : i32
    %c0_i32_2 = arith.constant 0 : i32
    return %c0_i32, %c0_i32_0, %c0_i32_1 : i32, i32, i32
  }
  func.func @transform_4(%arg0: i32) -> (i32, i32, i32) {
    %c0_i32 = arith.constant 0 : i32
    %c0_i32_0 = arith.constant 0 : i32
    %c0_i32_1 = arith.constant 0 : i32
    %c0_i32_2 = arith.constant 0 : i32
    return %c0_i32, %c0_i32_0, %c0_i32_1 : i32, i32, i32
  }
  func.func @transform_5(%arg0: i32) -> (i32, i32, i32) {
    %c0_i32 = arith.constant 0 : i32
    %c0_i32_0 = arith.constant 0 : i32
    %c0_i32_1 = arith.constant 0 : i32
    return %arg0, %c0_i32, %c0_i32_0 : i32, i32, i32
  }
}

</mosaic_0001>

<llo_original>
// kernel: tpu_custom_call.1
$region0: #{tpu_custom_call.1}
  #allocation0 [shape = 'u32[]', space=smem, size = 0x4, offset = 0x4, fixed_abs, tag = 'smem constant byte address 0x4 - core index']
  #allocation1 [shape = 'u32[72,128]{1,0:T(1,128)}', space=vmem, size = 0x9000, scoped, tag = 'internal scratch']
  %s0 = inlined_call_operand.vmem [shape: bf16[2,4,256], index: 0, kind: input, shape index: {}]
  %s1 = inlined_call_operand.vmem [shape: bf16[256,32], index: 1, kind: input, shape index: {}]
  %s2 = inlined_call_operand.vmem [shape: f32[1,32], index: 2, kind: input, shape index: {}]
  %s3 = inlined_call_operand.vmem [shape: f32[1,1,32], index: 3, kind: input, shape index: {}]
  %s4 = inlined_call_operand.vmem [shape: f32[1,5,32], index: 4, kind: input, shape index: {}]
  %s5 = inlined_call_operand.vmem [shape: bf16[2,5,32], index: 5, kind: output, shape index: {}]
  %s6 = sld [smem:[#allocation0]]
  $region53: #{tpu_custom_call.1} parent=0
    _
  %s8 = ssub.s32 1, %s6
  %s9 = scalar_select 0, %s8, %s6
  loop: start=0, step=1, limit=4
  $region2: #{tpu_custom_call.1} parent=0 // loop_pre_header
    _
  $region3: #{tpu_custom_call.1} parent=0 // loop_header
    %s11 = sphi 0, %s15
    %p12 = scmp.ge.s32.totalorder %s11, 4
    %s21 = sphi 0, %s23
    %s24 = sphi 0, %s21
    %s25 = sphi 0, %s24
    %s41 = sphi 0, %s25
    %s45 = sphi 0, %s45
    %s47 = sphi 0, %s45
    %s48 = sphi 0, %s47
    %s62 = sphi 0, %s48
    %s66 = sphi 0, %s66
    %s68 = sphi 0, %s66
    %s69 = sphi 0, %s68
    %s83 = sphi 0, %s69
    %s87 = sphi 0, %s87
    %s89 = sphi 0, %s87
    %s90 = sphi 0, %s89
    %s104 = sphi 0, %s90
    %s108 = sphi 0, %s108
    %s110 = sphi 0, %s108
    %s111 = sphi 0, %s110
    %s125 = sphi 0, %s111
    %s131 = sphi 0, %s133
    %s134 = sphi 0, %s131
    %s135 = sphi 0, %s134
    %s151 = sphi 0, %s135
  $region4: #{tpu_custom_call.1} parent=0 // loop_header_branch
    %14 = sbr.rel (%p12) target = $region8
  $region5: #{tpu_custom_call.1} parent=0 // loop_body
    %s16 = ssub.s32 %s11, 1
    %s17 = ssub.s32 %s11, 2
    %s18 = sadd.s32 %s11, 1
    %s19 = ssub.s32 %s11, %s18
    %p20 = scmp.eq.s32.totalorder %s19, 0
    %s22 = sadd.s32 %s21, 1
    %s23 = scalar_select %p20, %s21, %s22
    %p26 = pneg %p20
    %p27 = scmp.eq.s32.totalorder %s11, 1
    %p28 = por %p26, %p27
    %p29 = scmp.ne.s32.totalorder %s21, %s24
    %p30 = scmp.eq.s32.totalorder %s11, 0
    %p31 = por %p29, %p30
    %p32 = scmp.ne.s32.totalorder %s21, %s24
    %p33 = scmp.eq.s32.totalorder %s16, 1
    %p34 = por %p32, %p33
    %p35 = scmp.ne.s32.totalorder %s24, %s25
    %p36 = scmp.eq.s32.totalorder %s16, 0
    %p37 = por %p35, %p36
    %p38 = scmp.ne.s32.totalorder %s24, %s25
    %p39 = scmp.eq.s32.totalorder %s17, 1
    %p40 = por %p38, %p39
    %p42 = scmp.ne.s32.totalorder %s25, %s41
    %p43 = scmp.eq.s32.totalorder %s17, 0
    %p44 = por %p42, %p43
    %s46 = sadd.s32 %s45, 1
    %p49 = scmp.eq.s32.totalorder %s11, 1
    %p50 = scmp.ne.s32.totalorder %s45, %s47
    %p51 = scmp.eq.s32.totalorder %s11, 0
    %p52 = por %p50, %p51
    %p53 = scmp.ne.s32.totalorder %s45, %s47
    %p54 = scmp.eq.s32.totalorder %s16, 1
    %p55 = por %p53, %p54
    %p56 = scmp.ne.s32.totalorder %s47, %s48
    %p57 = scmp.eq.s32.totalorder %s16, 0
    %p58 = por %p56, %p57
    %p59 = scmp.ne.s32.totalorder %s47, %s48
    %p60 = scmp.eq.s32.totalorder %s17, 1
    %p61 = por %p59, %p60
    %p63 = scmp.ne.s32.totalorder %s48, %s62
    %p64 = scmp.eq.s32.totalorder %s17, 0
    %p65 = por %p63, %p64
    %s67 = sadd.s32 %s66, 1
    %p70 = scmp.eq.s32.totalorder %s11, 1
    %p71 = scmp.ne.s32.totalorder %s66, %s68
    %p72 = scmp.eq.s32.totalorder %s11, 0
    %p73 = por %p71, %p72
    %p74 = scmp.ne.s32.totalorder %s66, %s68
    %p75 = scmp.eq.s32.totalorder %s16, 1
    %p76 = por %p74, %p75
    %p77 = scmp.ne.s32.totalorder %s68, %s69
    %p78 = scmp.eq.s32.totalorder %s16, 0
    %p79 = por %p77, %p78
    %p80 = scmp.ne.s32.totalorder %s68, %s69
    %p81 = scmp.eq.s32.totalorder %s17, 1
    %p82 = por %p80, %p81
    %p84 = scmp.ne.s32.totalorder %s69, %s83
    %p85 = scmp.eq.s32.totalorder %s17, 0
    %p86 = por %p84, %p85
    %s88 = sadd.s32 %s87, 1
    %p91 = scmp.eq.s32.totalorder %s11, 1
    %p92 = scmp.ne.s32.totalorder %s87, %s89
    %p93 = scmp.eq.s32.totalorder %s11, 0
    %p94 = por %p92, %p93
    %p95 = scmp.ne.s32.totalorder %s87, %s89
    %p96 = scmp.eq.s32.totalorder %s16, 1
    %p97 = por %p95, %p96
    %p98 = scmp.ne.s32.totalorder %s89, %s90
    %p99 = scmp.eq.s32.totalorder %s16, 0
    %p100 = por %p98, %p99
    %p101 = scmp.ne.s32.totalorder %s89, %s90
    %p102 = scmp.eq.s32.totalorder %s17, 1
    %p103 = por %p101, %p102
    %p105 = scmp.ne.s32.totalorder %s90, %s104
    %p106 = scmp.eq.s32.totalorder %s17, 0
    %p107 = por %p105, %p106
    %s109 = sadd.s32 %s108, 1
    %p112 = scmp.eq.s32.totalorder %s11, 1
    %p113 = scmp.ne.s32.totalorder %s108, %s110
    %p114 = scmp.eq.s32.totalorder %s11, 0
    %p115 = por %p113, %p114
    %p116 = scmp.ne.s32.totalorder %s108, %s110
    %p117 = scmp.eq.s32.totalorder %s16, 1
    %p118 = por %p116, %p117
    %p119 = scmp.ne.s32.totalorder %s110, %s111
    %p120 = scmp.eq.s32.totalorder %s16, 0
    %p121 = por %p119, %p120
    %p122 = scmp.ne.s32.totalorder %s110, %s111
    %p123 = scmp.eq.s32.totalorder %s17, 1
    %p124 = por %p122, %p123
    %p126 = scmp.ne.s32.totalorder %s111, %s125
    %p127 = scmp.eq.s32.totalorder %s17, 0
    %p128 = por %p126, %p127
    %s129 = ssub.s32 %s11, %s18
    %p130 = scmp.eq.s32.totalorder %s129, 0
    %s132 = sadd.s32 %s131, 1
    %s133 = scalar_select %p130, %s131, %s132
    %p136 = pneg %p130
    %p137 = scmp.eq.s32.totalorder %s11, 1
    %p138 = por %p136, %p137
    %p139 = scmp.ne.s32.totalorder %s131, %s134
    %p140 = scmp.eq.s32.totalorder %s11, 0
    %p141 = por %p139, %p140
    %p142 = scmp.ne.s32.totalorder %s131, %s134
    %p143 = scmp.eq.s32.totalorder %s16, 1
    %p144 = por %p142, %p143
    %p145 = scmp.ne.s32.totalorder %s134, %s135
    %p146 = scmp.eq.s32.totalorder %s16, 0
    %p147 = por %p145, %p146
    %p148 = scmp.ne.s32.totalorder %s134, %s135
    %p149 = scmp.eq.s32.totalorder %s17, 1
    %p150 = por %p148, %p149
    %p152 = scmp.ne.s32.totalorder %s135, %s151
    %p153 = scmp.eq.s32.totalorder %s17, 0
    %p154 = por %p152, %p153
    %p155 = scmp.le.s32.totalorder 1, %s11
    %p156 = scmp.lt.s32.totalorder %s11, 3
    %p157 = pnand %p155, %p156
    %p158 = pneg %p157
    // Predicated region
    $region9: #{tpu_custom_call.1} parent=5 // pred_check
      _
    $region10: #{tpu_custom_call.1} parent=5 // pred_check_branch
      %160 = sbr.rel (%p157) target = $region12
    $region11: #{tpu_custom_call.1} parent=5 // pred_region
      %s161 = ssub.s32 %s11, 1
      // Predicated region
      $region13: #{tpu_custom_call.1} parent=11 // pred_check
        %p162 = pneg %p58
      $region14: #{tpu_custom_call.1} parent=11 // pred_check_branch
        %164 = sbr.rel (%p162) target = $region16
      $region15: #{tpu_custom_call.1} parent=11 // pred_region
        _
      $region16: #{tpu_custom_call.1} parent=11 // pred_fallthru
        _
      // Predicated region
      $region17: #{tpu_custom_call.1} parent=11 // pred_check
        %p165 = pneg %p79
      $region18: #{tpu_custom_call.1} parent=11 // pred_check_branch
        %167 = sbr.rel (%p165) target = $region20
      $region19: #{tpu_custom_call.1} parent=11 // pred_region
        _
      $region20: #{tpu_custom_call.1} parent=11 // pred_fallthru
        _
      // Predicated region
      $region21: #{tpu_custom_call.1} parent=11 // pred_check
        %p168 = pneg %p100
      $region22: #{tpu_custom_call.1} parent=11 // pred_check_branch
        %170 = sbr.rel (%p168) target = $region24
      $region23: #{tpu_custom_call.1} parent=11 // pred_region
        _
      $region24: #{tpu_custom_call.1} parent=11 // pred_fallthru
        _
      // Predicated region
      $region25: #{tpu_custom_call.1} parent=11 // pred_check
        %p171 = pneg %p121
      $region26: #{tpu_custom_call.1} parent=11 // pred_check_branch
        %173 = sbr.rel (%p171) target = $region28
      $region27: #{tpu_custom_call.1} parent=11 // pred_region
        _
      $region28: #{tpu_custom_call.1} parent=11 // pred_fallthru
        _
    $region12: #{tpu_custom_call.1} parent=5 // pred_fallthru
      _
    %p174 = scmp.lt.s32.totalorder %s11, 2
    // Predicated region
    $region29: #{tpu_custom_call.1} parent=5 // pred_check
      %p175 = pneg %p174
    $region30: #{tpu_custom_call.1} parent=5 // pred_check_branch
      %177 = sbr.rel (%p175) target = $region32
    $region31: #{tpu_custom_call.1} parent=5 // pred_region
      // Predicated region
      $region33: #{tpu_custom_call.1} parent=31 // pred_check
        %p178 = pneg %p31
      $region34: #{tpu_custom_call.1} parent=31 // pred_check_branch
        %180 = sbr.rel (%p178) target = $region36
      $region35: #{tpu_custom_call.1} parent=31 // pred_region
        %p181 = scmp.lt.s32.totalorder %s11, 1
        %s182 = scalar_select %p181, %s11, 1
        %s183 = smul.addr %s182, 2
        %s184 = smul.addr %s183, 2
        %s185 = scalar_lea.vmem %s0, %s184
      $region36: #{tpu_custom_call.1} parent=31 // pred_fallthru
        _
    $region32: #{tpu_custom_call.1} parent=5 // pred_fallthru
      _
    %p186 = scmp.le.s32.totalorder 1, %s11
    %p187 = scmp.lt.s32.totalorder %s11, 3
    %p188 = pnand %p186, %p187
    %p189 = pneg %p188
    // Predicated region
    $region37: #{tpu_custom_call.1} parent=5 // pred_check
      _
    $region38: #{tpu_custom_call.1} parent=5 // pred_check_branch
      %191 = sbr.rel (%p188) target = $region40
    $region39: #{tpu_custom_call.1} parent=5 // pred_region
      %s192 = ssub.s32 %s11, 1
      %p193 = scmp.lt.s32.totalorder %s16, 1
      %s194 = scalar_select %p193, %s16, 1
      %s195 = smul.addr %s194, 2
      %s196 = smul.addr %s195, 2
      %s197 = scalar_lea.vmem %s0, %s196
      %p198 = pneg %p37
      %p199 = pneg %p34
      %p200 = pneg %p58
      %p201 = pneg %p55
      %p202 = pneg %p79
      %p203 = pneg %p76
      %p204 = pneg %p100
      %p205 = pneg %p97
      %p206 = pneg %p121
      %p207 = pneg %p118
      %p208 = pneg %p147
      %p209 = pneg %p144
      %p210 = scmp.lt.s32.totalorder %s16, 1
      %s211 = scalar_select %p210, %s16, 1
      %s212 = smul.addr %s211, 4
      %s213 = scalar_lea.vmem %s5, %s212
      %p214 = scmp.lt.s32.totalorder %s16, 1
      %s215 = scalar_select %p214, %s16, 1
      %s216 = smul.addr %s215, 2
      %s217 = smul.addr %s216, 2
      %s218 = scalar_lea.vmem %s0, %s217
      %p219 = scmp.lt.s32.totalorder %s16, 1
      %s220 = scalar_select %p219, %s16, 1
      %s221 = smul.addr %s220, 4
      %s222 = scalar_lea.vmem %s5, %s221
      %v223 = vld [vmem:[%s218] sm:$0xf]
      %v224 = vld [vmem:[%s1] sm:$0xf]
      %v225 = vld [vmem:[%s1 + $0x4] sm:$0xf]
      %v226 = vld [vmem:[%s1 + $0x8] sm:$0xf]
      %v227 = vld [vmem:[%s1 + $0xc] sm:$0xf]
      %v228 = vld [vmem:[%s1 + $0x10] sm:$0xf]
      %v229 = vld [vmem:[%s1 + $0x14] sm:$0xf]
      %v230 = vld [vmem:[%s1 + $0x18] sm:$0xf]
      %v231 = vld [vmem:[%s1 + $0x1c] sm:$0xf]
      %v232 = vld [vmem:[%s1 + $0x20] sm:$0xf]
      %v233 = vld [vmem:[%s1 + $0x24] sm:$0xf]
      %v234 = vld [vmem:[%s1 + $0x28] sm:$0xf]
      %v235 = vld [vmem:[%s1 + $0x2c] sm:$0xf]
      %v236 = vld [vmem:[%s1 + $0x30] sm:$0xf]
      %v237 = vld [vmem:[%s1 + $0x34] sm:$0xf]
      %v238 = vld [vmem:[%s1 + $0x38] sm:$0xf]
      %v239 = vld [vmem:[%s1 + $0x3c] sm:$0xf]
      %v240 = vld [vmem:[%s1 + $0x40] sm:$0xf]
      %v241 = vld [vmem:[%s1 + $0x44] sm:$0xf]
      %v242 = vld [vmem:[%s1 + $0x48] sm:$0xf]
      %v243 = vld [vmem:[%s1 + $0x4c] sm:$0xf]
      %v244 = vld [vmem:[%s1 + $0x50] sm:$0xf]
      %v245 = vld [vmem:[%s1 + $0x54] sm:$0xf]
      %v246 = vld [vmem:[%s1 + $0x58] sm:$0xf]
      %v247 = vld [vmem:[%s1 + $0x5c] sm:$0xf]
      %v248 = vld [vmem:[%s1 + $0x60] sm:$0xf]
      %v249 = vld [vmem:[%s1 + $0x64] sm:$0xf]
      %v250 = vld [vmem:[%s1 + $0x68] sm:$0xf]
      %v251 = vld [vmem:[%s1 + $0x6c] sm:$0xf]
      %v252 = vld [vmem:[%s1 + $0x70] sm:$0xf]
      %v253 = vld [vmem:[%s1 + $0x74] sm:$0xf]
      %v254 = vld [vmem:[%s1 + $0x78] sm:$0xf]
      %v255 = vld [vmem:[%s1 + $0x7c] sm:$0xf]
      %v256 = vld [vmem:[%s2] sm:$0x1]
      %v258 = vperm.slane %v256, 0
      %261 = vst [vmem:[#allocation1] ss:$4 sm:$0xff] %v223
      %v262 = vld.sshfl [vmem:[#allocation1] sm:$0xff pattern:$0x73625140]
      %v263 = vld.sshfl [vmem:[#allocation1 + $0x8] sm:$0xff pattern:$0x73625140]
      %v298 = vunpack.c.l.b16 %v224
      %v299 = vunpack.c.l.b16 %v225
      %v300 = vunpack.c.l.b16 %v226
      %v301 = vunpack.c.l.b16 %v227
      %v302 = vunpack.c.l.b16 %v228
      %v303 = vunpack.c.l.b16 %v229
      %v304 = vunpack.c.l.b16 %v230
      %v305 = vunpack.c.l.b16 %v231
      %v306 = vunpack.c.l.b16 %v232
      %v307 = vunpack.c.l.b16 %v233
      %v308 = vunpack.c.l.b16 %v234
      %v309 = vunpack.c.l.b16 %v235
      %v310 = vunpack.c.l.b16 %v236
      %v311 = vunpack.c.l.b16 %v237
      %v312 = vunpack.c.l.b16 %v238
      %v313 = vunpack.c.l.b16 %v239
      %v314 = vunpack.c.l.b16 %v240
      %v315 = vunpack.c.l.b16 %v241
      %v316 = vunpack.c.l.b16 %v242
      %v317 = vunpack.c.l.b16 %v243
      %v318 = vunpack.c.l.b16 %v244
      %v319 = vunpack.c.l.b16 %v245
      %v320 = vunpack.c.l.b16 %v246
      %v321 = vunpack.c.l.b16 %v247
      %v322 = vunpack.c.l.b16 %v248
      %v323 = vunpack.c.l.b16 %v249
      %v324 = vunpack.c.l.b16 %v250
      %v325 = vunpack.c.l.b16 %v251
      %v326 = vunpack.c.l.b16 %v252
      %v327 = vunpack.c.l.b16 %v253
      %v328 = vunpack.c.l.b16 %v254
      %v329 = vunpack.c.l.b16 %v255
      %v330 = vpack.c.b16 %v299, %v298
      %v331 = vpack.c.b16 %v301, %v300
      %v332 = vpack.c.b16 %v303, %v302
      %v333 = vpack.c.b16 %v305, %v304
      %v334 = vpack.c.b16 %v307, %v306
      %v335 = vpack.c.b16 %v309, %v308
      %v336 = vpack.c.b16 %v311, %v310
      %v337 = vpack.c.b16 %v313, %v312
      %v338 = vpack.c.b16 %v315, %v314
      %v339 = vpack.c.b16 %v317, %v316
      %v340 = vpack.c.b16 %v319, %v318
      %v341 = vpack.c.b16 %v321, %v320
      %v342 = vpack.c.b16 %v323, %v322
      %v343 = vpack.c.b16 %v325, %v324
      %v344 = vpack.c.b16 %v327, %v326
      %v345 = vpack.c.b16 %v329, %v328
      %362 = vmatpush.bf16.msra.mxu0 %v337
      %363 = vmatpush.bf16.msra.mxu0 %v336
      %364 = vmatpush.bf16.msra.mxu0 %v335
      %365 = vmatpush.bf16.msra.mxu0 %v334
      %366 = vmatpush.bf16.msra.mxu0 %v333
      %367 = vmatpush.bf16.msra.mxu0 %v332
      %368 = vmatpush.bf16.msra.mxu0 %v331
      %369 = vmatpush.bf16.msra.mxu0 %v330
      %370 = vmatmul.bf16.gmra.mxu0 %v262
      %v371 = vpop.f32.mrf.mxu0
      %v372 = vadd.f32 %v258, %v371
      %v373 = vpop.f32.mrf.mxu0
      %374 = vdwg.mxu0
      %375 = vmatpush.bf16.msra.mxu0 %v345
      %376 = vmatpush.bf16.msra.mxu0 %v344
      %377 = vmatpush.bf16.msra.mxu0 %v343
      %378 = vmatpush.bf16.msra.mxu0 %v342
      %379 = vmatpush.bf16.msra.mxu0 %v341
      %380 = vmatpush.bf16.msra.mxu0 %v340
      %381 = vmatpush.bf16.msra.mxu0 %v339
      %382 = vmatpush.bf16.msra.mxu0 %v338
      %383 = vmatmul.bf16.gmra.mxu0 %v263
      %v384 = vpop.f32.mrf.mxu0
      %v385 = vadd.f32 %v372, %v384
      %v386 = vpop.f32.mrf.mxu0
      %387 = vdwg.mxu0
      %v388 = vld [vmem:[%s3] sm:$0x1]
      %v390 = vrot.slane %v385, 7
      %vm392 = vcmask 1040384
      %v393 = vsel %vm392, %v388, %v390
      %v394 = vld [vmem:[%s4] sm:$0x1f]
      %v395 = vadd.f32 %v393, %v394
      %v396 = vpack.c.bf16 %v395, %v395
      %vm397 = vcmask 256000
      %vm398 = vsmask.f32 2304
      %vm399 = vmand %vm397, %vm398
      %v400 = vld [vmem:[%s222] sm:$0x7]
      %v401 = vsel %vm399, %v396, %v400
      %402 = vst [vmem:[%s222] sm:$0x7] %v401
      %p403 = scmp.lt.s32.totalorder %s16, 1
      %s404 = scalar_select %p403, %s16, 1
      %s405 = smul.addr %s404, 4
      %s406 = scalar_lea.vmem %s5, %s405
      // Predicated region
      $region41: #{tpu_custom_call.1} parent=39 // pred_check
        %p407 = pneg %p144
      $region42: #{tpu_custom_call.1} parent=39 // pred_check_branch
        %409 = sbr.rel (%p407) target = $region44
      $region43: #{tpu_custom_call.1} parent=39 // pred_region
        _
      $region44: #{tpu_custom_call.1} parent=39 // pred_fallthru
        _
    $region40: #{tpu_custom_call.1} parent=5 // pred_fallthru
      _
    %p410 = scmp.le.s32.totalorder 2, %s11
    // Predicated region
    $region45: #{tpu_custom_call.1} parent=5 // pred_check
      %p411 = pneg %p410
    $region46: #{tpu_custom_call.1} parent=5 // pred_check_branch
      %413 = sbr.rel (%p411) target = $region48
    $region47: #{tpu_custom_call.1} parent=5 // pred_region
      %s414 = ssub.s32 %s11, 2
      // Predicated region
      $region49: #{tpu_custom_call.1} parent=47 // pred_check
        %p415 = pneg %p150
      $region50: #{tpu_custom_call.1} parent=47 // pred_check_branch
        %417 = sbr.rel (%p415) target = $region52
      $region51: #{tpu_custom_call.1} parent=47 // pred_region
        %p418 = scmp.lt.s32.totalorder %s17, 1
        %s419 = scalar_select %p418, %s17, 1
        %s420 = smul.addr %s419, 4
        %s421 = scalar_lea.vmem %s5, %s420
      $region52: #{tpu_custom_call.1} parent=47 // pred_fallthru
        _
    $region48: #{tpu_custom_call.1} parent=5 // pred_fallthru
      _
  $region6: #{tpu_custom_call.1} parent=0 // loop_footer
    %s15 = sadd.s32 1, %s11
  $region7: #{tpu_custom_call.1} parent=0 // loop_footer_branch
    %10 = sbr.rel target = $region3
  $region8: #{tpu_custom_call.1} parent=0 // loop_exit
    _

</llo_original>
